<compile_context>
chip_gen: v6e
topology: v6e:2x2x1
jax: 0.10.0
libtpu: 0.0.40
codegen_flags: <defaults>
</compile_context>

<pallas_src>
import functools
import math

import jax
import jax.numpy as jnp
from jax.experimental import pallas as pl
from jax.experimental.pallas import tpu as pltpu

_LANES = 128


def _pe_kernel(seed_ref, x_ref, pe_ref, o_ref, *, dropout_p, training, rows_per_tile):
    # x_ref: (1, TR, 128) block for one batch element; pe_ref: (TR, 128) tile.
    y = x_ref[0] + pe_ref[...]  # compute in the input dtype

    if training and 0.0 < dropout_p < 1.0:
        # Stateless counter-based PRNG: hash of (seed, batch, global element
        # index).  Independent of grid iteration order -> axes stay "parallel".
        # TODO(synk): RNG stream intentionally differs from torch's nn.Dropout.
        s_tile = pl.program_id(0)
        b = pl.program_id(1)
        seed = seed_ref[0].astype(jnp.uint32)
        row0 = (s_tile * rows_per_tile).astype(jnp.uint32)

        rows = jax.lax.broadcasted_iota(jnp.int32, y.shape, 0).astype(jnp.uint32) + row0
        cols = jax.lax.broadcasted_iota(jnp.int32, y.shape, 1).astype(jnp.uint32)
        h = rows * jnp.uint32(_LANES) + cols
        h = h + b.astype(jnp.uint32) * jnp.uint32(0x9E3779B1)
        h = h ^ (seed * jnp.uint32(0x85EBCA6B) + jnp.uint32(0xC2B2AE35))
        # murmur3 fmix32 finalizer
        h = h ^ (h >> 16)
        h = h * jnp.uint32(0x85EBCA6B)
        h = h ^ (h >> 13)
        h = h * jnp.uint32(0xC2B2AE35)
        h = h ^ (h >> 16)

        # Integer threshold compare on the low 24 bits (no float convert).
        threshold = jnp.uint32(int(round(float(dropout_p) * float(1 << 24))))
        keep = (h & jnp.uint32(0xFFFFFF)) >= threshold
        scale = jnp.asarray(1.0 / (1.0 - dropout_p), dtype=y.dtype)
        y = jnp.where(keep, y * scale, jnp.zeros_like(y))

    o_ref[0] = y.astype(o_ref.dtype)


def make_pe_table(d_model, max_len=2000, dtype=jnp.float32):
    """Deterministic sin/cos positional-encoding table, identical to the torch init."""
    position = jnp.arange(0.0, max_len, dtype=jnp.float32)[:, None]           # (max_len, 1)
    div_term = jnp.exp(jnp.arange(0.0, d_model, 2.0, dtype=jnp.float32)
                       * -(math.log(10000.0) / d_model))                       # (d_model//2,)
    pe = jnp.zeros((max_len, d_model), dtype=jnp.float32)
    pe = pe.at[:, 0::2].set(jnp.sin(position * div_term))
    pe = pe.at[:, 1::2].set(jnp.cos(position * div_term))
    return pe.astype(dtype)                                                    # (max_len, d_model)


def positional_encoding(x, pe, *, dropout_p=0.1, training=False, seed=0):
    """x: (B, S, D); pe: (max_len, D). Returns dropout(x + pe[:S])."""
    B, S, D = x.shape
    pe_s = pe[:S, :].astype(x.dtype)  # (S, D), matches pe[:, :x.size(1)]

    if training and dropout_p >= 1.0:
        # nn.Dropout(p=1.0) zeroes everything; avoid 1/(1-p) div-by-zero.
        return jnp.zeros_like(x)

    # ----- lane-dense view: (B, S, D) -> (B, R, 128), pe -> (R, 128) -----
    N = S * D
    pad = (-N) % _LANES
    x_flat = x.reshape(B, N)
    pe_flat = pe_s.reshape(N)
    if pad:
        # TODO(synk): padding materializes one extra copy of x; only hit when
        # S*D is not a multiple of 128.
        x_flat = jnp.pad(x_flat, ((0, 0), (0, pad)))
        pe_flat = jnp.pad(pe_flat, ((0, pad),))
    Np = N + pad
    R = Np // _LANES
    x_v = x_flat.reshape(B, R, _LANES)
    pe_v = pe_flat.reshape(R, _LANES)

    # ----- block sizing: ~1 MiB per block (safe for v5e/v6e/v7x VMEM limits) -----
    itemsize = jnp.dtype(x.dtype).itemsize
    target_bytes = 1 << 20
    tr = max(8, (target_bytes // (_LANES * itemsize)) // 8 * 8)
    if tr >= R:
        tr = R  # full extent (allowed even if R is not a multiple of 8)
    n_tiles = pl.cdiv(R, tr)

    kernel = functools.partial(
        _pe_kernel,
        dropout_p=float(dropout_p),
        training=bool(training),
        rows_per_tile=int(tr),
    )
    seed_arr = jnp.array([seed], dtype=jnp.int32)

    out_v = pl.pallas_call(
        kernel,
        out_shape=jax.ShapeDtypeStruct((B, R, _LANES), x.dtype),
        grid_spec=pltpu.PrefetchScalarGridSpec(
            num_scalar_prefetch=1,
            # row-tile outer, batch inner: pe's block index is constant over the
            # inner axis, so the pe tile is fetched once per row tile.
            grid=(n_tiles, B),
            in_specs=[
                pl.BlockSpec((1, tr, _LANES), lambda s, b, seed: (b, s, 0)),  # x
                pl.BlockSpec((tr, _LANES), lambda s, b, seed: (s, 0)),        # pe (batch-invariant)
            ],
            out_specs=pl.BlockSpec((1, tr, _LANES), lambda s, b, seed: (b, s, 0)),
        ),
        compiler_params=pltpu.CompilerParams(
            # no cross-step state (stateless hash RNG) -> fully parallel grid
            dimension_semantics=("parallel", "parallel"),
        ),
    )(seed_arr, x_v, pe_v)

    out = out_v.reshape(B, Np)
    if pad:
        out = out[:, :N]
    return out.reshape(B, S, D)


if __name__ == "__main__":
    # Small shapes consistent with the module: batch=2, seq=8, d_model=32.
    B, S, D = 2, 8, 32
    key = jax.random.PRNGKey(0)
    x = jax.random.normal(key, (B, S, D), dtype=jnp.float32)

    pe = make_pe_table(d_model=D, max_len=2000)
    ref = x + pe[:S][None, :, :]

    # Eval-mode forward (dropout is identity in eval, as in nn.Dropout.eval()).
    out = jax.block_until_ready(positional_encoding(x, pe, dropout_p=0.1, training=False))
    assert out.shape == (B, S, D) and out.dtype == x.dtype
    assert jnp.allclose(out, ref, atol=1e-6, rtol=1e-6), "mismatch vs reference (eval)"

    # Train-mode forward: elements are either dropped (0) or scaled by 1/(1-p).
    p = 0.1
    out_train = jax.block_until_ready(
        positional_encoding(x, pe, dropout_p=p, training=True, seed=123))
    assert out_train.shape == (B, S, D)
    keep_mask = (out_train != 0).astype(jnp.float32)
    assert jnp.allclose(out_train, ref * (1.0 / (1.0 - p)) * keep_mask,
                        atol=1e-5, rtol=1e-5), "mismatch vs reference (train)"

    print("KERNEL_OK")
</pallas_src>

<mosaic_0001>
module attributes {stable_mosaic.version = 11 : i64} {
  func.func @_pe_kernel(%arg0: i32, %arg1: i32, %arg2: memref<1xi32, #tpu.memory_space<smem>>, %arg3: memref<1x2x128xf32, #tpu.memory_space<vmem>>, %arg4: memref<2x128xf32, #tpu.memory_space<vmem>>, %arg5: memref<1x2x128xf32, #tpu.memory_space<vmem>>) attributes {dimension_semantics = [#tpu.dimension_semantics<parallel>, #tpu.dimension_semantics<parallel>], iteration_bounds = array<i64: 1, 2>, scalar_prefetch = 1 : i64, scratch_operands = 0 : i64, tpu.core_type = #tpu.core_type<tc>, window_params = [{transform_indices = @transform_0, window_bounds = array<i64: 1, 2, 128>}, {transform_indices = @transform_1, window_bounds = array<i64: 2, 128>}, {transform_indices = @transform_2, window_bounds = array<i64: 1, 2, 128>}]} {
    %c0 = arith.constant 0 : index
    %c0_0 = arith.constant 0 : index
    %c0_1 = arith.constant 0 : index
    %0 = vector.load %arg3[%c0, %c0_0, %c0_1] : memref<1x2x128xf32, #tpu.memory_space<vmem>>, vector<1x2x128xf32>
    %1 = vector.shape_cast %0 : vector<1x2x128xf32> to vector<2x128xf32>
    %c0_2 = arith.constant 0 : index
    %c0_3 = arith.constant 0 : index
    %2 = vector.load %arg4[%c0_2, %c0_3] : memref<2x128xf32, #tpu.memory_space<vmem>>, vector<2x128xf32>
    %3 = arith.addf %1, %2 : vector<2x128xf32>
    %c0_4 = arith.constant 0 : index
    %c0_5 = arith.constant 0 : index
    %c0_6 = arith.constant 0 : index
    %4 = vector.load %arg5[%c0_4, %c0_5, %c0_6] : memref<1x2x128xf32, #tpu.memory_space<vmem>>, vector<1x2x128xf32>
    %5 = vector.shape_cast %4 : vector<1x2x128xf32> to vector<2x128xf32>
    %6 = vector.shape_cast %3 : vector<2x128xf32> to vector<1x2x128xf32>
    tpu.vector_store %arg5[%c0_4, %c0_5, %c0_6], %6 {strides = array<i32>} : memref<1x2x128xf32, #tpu.memory_space<vmem>>, vector<1x2x128xf32>,
    return
  }
  func.func @transform_0(%arg0: i32, %arg1: i32, %arg2: memref<1xi32, #tpu.memory_space<smem>>) -> (i32, i32, i32) {
    %c0_i32 = arith.constant 0 : i32
    %c0_i32_0 = arith.constant 0 : i32
    return %arg1, %arg0, %c0_i32 : i32, i32, i32
  }
  func.func @transform_1(%arg0: i32, %arg1: i32, %arg2: memref<1xi32, #tpu.memory_space<smem>>) -> (i32, i32) {
    %c0_i32 = arith.constant 0 : i32
    %c0_i32_0 = arith.constant 0 : i32
    return %arg0, %c0_i32 : i32, i32
  }
  func.func @transform_2(%arg0: i32, %arg1: i32, %arg2: memref<1xi32, #tpu.memory_space<smem>>) -> (i32, i32, i32) {
    %c0_i32 = arith.constant 0 : i32
    %c0_i32_0 = arith.constant 0 : i32
    return %arg1, %arg0, %c0_i32 : i32, i32, i32
  }
}

</mosaic_0001>

<llo_original>
// kernel: tpu_custom_call.1
$region0: #{tpu_custom_call.1}
  #allocation0 [shape = 'u32[]', space=smem, size = 0x4, offset = 0x4, fixed_abs, tag = 'smem constant byte address 0x4 - core index']
  #allocation1 [shape = 'u32[144,128]{1,0:T(1,128)}', space=vmem, size = 0x12000, scoped, tag = 'internal scratch']
  #allocation2 [shape = 's32[1]{0}', space=sflag, size = 0x4, scoped, tag = 'scoped memory for tpu_custom_call.1']
  #allocation3 [shape = 's32[1]{0:T(128)S(6)}', space=smem, size = 0x200, scoped, tag = 'prefetched SMEM operand 0']
  %s0 = inlined_call_operand.<no memory space> [shape: s32[1], index: 0, kind: input, shape index: {}]
  %s1 = inlined_call_operand.hbm [shape: f32[2,2,128], index: 1, kind: input, shape index: {}]
  %s2 = inlined_call_operand.vmem [shape: f32[2,128], index: 2, kind: input, shape index: {}]
  %s3 = inlined_call_operand.hbm [shape: f32[2,2,128], index: 3, kind: output, shape index: {}]
  %s4 = sld [smem:[#allocation0]]
  $region45: #{tpu_custom_call.1} parent=0
    _
  %s6 = ssub.s32 1, %s4
  %s7 = scalar_select 0, %s6, %s4
  %8 = sst [smem:[#allocation3]] %s0
  $region1: #{tpu_custom_call.1} parent=0
    #allocation4 [shape = 'u8[2048]{0}', space=vmem, size = 0x800, scoped, tag = 'input window, operand 1']
    #allocation5 [shape = 's32[2]{0}', space=sflag, size = 0x8, scoped, tag = 'scoped memory for tpu_custom_call.1']
    #allocation6 [shape = 's32[2]{0}', space=sflag, size = 0x8, scoped, tag = 'scoped memory for tpu_custom_call.1']
    #allocation7 [shape = 'u8[2048]{0}', space=vmem, size = 0x800, scoped, tag = 'output window, operand 0']
    %9 = vsyncpa [#allocation5], 0
    %s10 = scalar_lea.sflag [#allocation5], 1
    %11 = vsyncpa %s10, 0
    %12 = vsyncpa [#allocation6], 0
    %s13 = scalar_lea.sflag [#allocation6], 1
    %14 = vsyncpa %s13, 0
    loop: start=0, step=1, limit=4
    $region2: #{tpu_custom_call.1} parent=1 // loop_pre_header
      _
    $region3: #{tpu_custom_call.1} parent=1 // loop_header
      %s16 = sphi 0, %s20
      %p17 = scmp.ge.s32.totalorder %s16, 4
      %s23 = sphi 0, %s35
      %s24 = sphi 0, %s31
      %s25 = sphi 0, %s23
      %s26 = sphi 0, %s24
      %s27 = sphi 0, %s25
      %s28 = sphi 0, %s26
      %s40 = sphi 0, %s42
      %s43 = sphi 0, %s40
      %s44 = sphi 0, %s43
      %s60 = sphi 0, %s44
      %s66 = sphi 0, %s68
      %s69 = sphi 0, %s66
      %s70 = sphi 0, %s69
      %s86 = sphi 0, %s70
      %s94 = sphi 0, %s96
      %s97 = sphi 0, %s94
      %s98 = sphi 0, %s97
      %s114 = sphi 0, %s98
    $region4: #{tpu_custom_call.1} parent=1 // loop_header_branch
      %19 = sbr.rel (%p17) target = $region8
    $region5: #{tpu_custom_call.1} parent=1 // loop_body
      %s21 = ssub.s32 %s16, 1
      %s22 = ssub.s32 %s16, 2
      %s29 = sadd.s32 1, %s24
      %p30 = scmp.ge.s32.totalorder %s29, 2
      %s31 = scalar_select %p30, 0, %s29
      %s32 = sadd.s32 1, %s23
      %s33 = scalar_select %p30, %s32, %s23
      %p34 = scmp.ge.s32.totalorder %s33, 1
      %s35 = scalar_select %p34, 0, %s33
      %s36 = ssub.s32 %s24, %s31
      %s37 = ssub.s32 %s23, %s35
      %s38 = sor.u32 %s36, %s37
      %p39 = scmp.eq.s32.totalorder %s38, 0
      %s41 = sadd.s32 %s40, 1
      %s42 = scalar_select %p39, %s40, %s41
      %p45 = pneg %p39
      %p46 = scmp.eq.s32.totalorder %s16, 1
      %p47 = por %p45, %p46
      %p48 = scmp.ne.s32.totalorder %s40, %s43
      %p49 = scmp.eq.s32.totalorder %s16, 0
      %p50 = por %p48, %p49
      %p51 = scmp.ne.s32.totalorder %s40, %s43
      %p52 = scmp.eq.s32.totalorder %s21, 1
      %p53 = por %p51, %p52
      %p54 = scmp.ne.s32.totalorder %s43, %s44
      %p55 = scmp.eq.s32.totalorder %s21, 0
      %p56 = por %p54, %p55
      %p57 = scmp.ne.s32.totalorder %s43, %s44
      %p58 = scmp.eq.s32.totalorder %s22, 1
      %p59 = por %p57, %p58
      %p61 = scmp.ne.s32.totalorder %s44, %s60
      %p62 = scmp.eq.s32.totalorder %s22, 0
      %p63 = por %p61, %p62
      %s64 = ssub.s32 %s23, %s35
      %p65 = scmp.eq.s32.totalorder %s64, 0
      %s67 = sadd.s32 %s66, 1
      %s68 = scalar_select %p65, %s66, %s67
      %p71 = pneg %p65
      %p72 = scmp.eq.s32.totalorder %s16, 1
      %p73 = por %p71, %p72
      %p74 = scmp.ne.s32.totalorder %s66, %s69
      %p75 = scmp.eq.s32.totalorder %s16, 0
      %p76 = por %p74, %p75
      %p77 = scmp.ne.s32.totalorder %s66, %s69
      %p78 = scmp.eq.s32.totalorder %s21, 1
      %p79 = por %p77, %p78
      %p80 = scmp.ne.s32.totalorder %s69, %s70
      %p81 = scmp.eq.s32.totalorder %s21, 0
      %p82 = por %p80, %p81
      %p83 = scmp.ne.s32.totalorder %s69, %s70
      %p84 = scmp.eq.s32.totalorder %s22, 1
      %p85 = por %p83, %p84
      %p87 = scmp.ne.s32.totalorder %s70, %s86
      %p88 = scmp.eq.s32.totalorder %s22, 0
      %p89 = por %p87, %p88
      %s90 = ssub.s32 %s24, %s31
      %s91 = ssub.s32 %s23, %s35
      %s92 = sor.u32 %s90, %s91
      %p93 = scmp.eq.s32.totalorder %s92, 0
      %s95 = sadd.s32 %s94, 1
      %s96 = scalar_select %p93, %s94, %s95
      %p99 = pneg %p93
      %p100 = scmp.eq.s32.totalorder %s16, 1
      %p101 = por %p99, %p100
      %p102 = scmp.ne.s32.totalorder %s94, %s97
      %p103 = scmp.eq.s32.totalorder %s16, 0
      %p104 = por %p102, %p103
      %p105 = scmp.ne.s32.totalorder %s94, %s97
      %p106 = scmp.eq.s32.totalorder %s21, 1
      %p107 = por %p105, %p106
      %p108 = scmp.ne.s32.totalorder %s97, %s98
      %p109 = scmp.eq.s32.totalorder %s21, 0
      %p110 = por %p108, %p109
      %p111 = scmp.ne.s32.totalorder %s97, %s98
      %p112 = scmp.eq.s32.totalorder %s22, 1
      %p113 = por %p111, %p112
      %p115 = scmp.ne.s32.totalorder %s98, %s114
      %p116 = scmp.eq.s32.totalorder %s22, 0
      %p117 = por %p115, %p116
      %p118 = scmp.le.s32.totalorder 1, %s16
      %p119 = scmp.lt.s32.totalorder %s16, 3
      %p120 = pnand %p118, %p119
      %p121 = pneg %p120
      // Predicated region
      $region9: #{tpu_custom_call.1} parent=5 // pred_check
        _
      $region10: #{tpu_custom_call.1} parent=5 // pred_check_branch
        %123 = sbr.rel (%p120) target = $region12
      $region11: #{tpu_custom_call.1} parent=5 // pred_region
        %s124 = ssub.s32 %s16, 1
        // Predicated region
        $region13: #{tpu_custom_call.1} parent=11 // pred_check
          %p125 = pneg %p82
        $region14: #{tpu_custom_call.1} parent=11 // pred_check_branch
          %127 = sbr.rel (%p125) target = $region16
        $region15: #{tpu_custom_call.1} parent=11 // pred_region
          %p128 = scmp.lt.s32.totalorder %s25, 0
          %s129 = scalar_select %p128, %s25, 0
          %s130 = smul.addr %s129, 2
          %s131 = scalar_lea.vmem %s2, %s130
        $region16: #{tpu_custom_call.1} parent=11 // pred_fallthru
          _
      $region12: #{tpu_custom_call.1} parent=5 // pred_fallthru
        _
      %p132 = scmp.lt.s32.totalorder %s16, 2
      // Predicated region
      $region17: #{tpu_custom_call.1} parent=5 // pred_check
        %p133 = pneg %p132
      $region18: #{tpu_custom_call.1} parent=5 // pred_check_branch
        %135 = sbr.rel (%p133) target = $region20
      $region19: #{tpu_custom_call.1} parent=5 // pred_region
        // Predicated region
        $region21: #{tpu_custom_call.1} parent=19 // pred_check
          %p136 = pneg %p50
        $region22: #{tpu_custom_call.1} parent=19 // pred_check_branch
          %138 = sbr.rel (%p136) target = $region24
        $region23: #{tpu_custom_call.1} parent=19 // pred_region
          %s139 = sand.u32 %s40, 1
          %s140 = scalar_lea.sflag [#allocation5], %s139
          %s141 = sand.u32 %s40, 1
          %s142 = smul.addr %s141, 2
          %s143 = scalar_lea.vmem [#allocation4], %s142
          %s145 = ssub.s32 32, 32
          %146 = vsyncadd %s140, %s145
          %s147 = sadd.s32 %s23, %s24
          %s148 = smul.addr %s147, 32
          %s149 = scalar_lea.hbm %s1, %s148
          %s151 = sshll.u32 %s143, 4
          %s152 = int_to_ptr.vmem [resolvable:$true] %s151
          %154 = dma.hbm_to_vmem [thread:$0]  %s149, 32, %s152, %s140
        $region24: #{tpu_custom_call.1} parent=19 // pred_fallthru
          _
      $region20: #{tpu_custom_call.1} parent=5 // pred_fallthru
        _
      %p155 = scmp.le.s32.totalorder 1, %s16
      %p156 = scmp.lt.s32.totalorder %s16, 3
      %p157 = pnand %p155, %p156
      %p158 = pneg %p157
      // Predicated region
      $region25: #{tpu_custom_call.1} parent=5 // pred_check
        _
      $region26: #{tpu_custom_call.1} parent=5 // pred_check_branch
        %160 = sbr.rel (%p157) target = $region28
      $region27: #{tpu_custom_call.1} parent=5 // pred_region
        %s161 = ssub.s32 %s16, 1
        %s162 = sand.u32 %s43, 1
        %s163 = scalar_lea.sflag [#allocation5], %s162
        %s164 = sand.u32 %s43, 1
        %s165 = smul.addr %s164, 2
        %s166 = scalar_lea.vmem [#allocation4], %s165
        // Predicated region
        $region29: #{tpu_custom_call.1} parent=27 // pred_check
          %p167 = pneg %p56
        $region30: #{tpu_custom_call.1} parent=27 // pred_check_branch
          %169 = sbr.rel (%p167) target = $region32
        $region31: #{tpu_custom_call.1} parent=27 // pred_region
          %170 = dma.done %s163, 32
        $region32: #{tpu_custom_call.1} parent=27 // pred_fallthru
          _
        %s171 = sand.u32 %s43, 1
        %s172 = scalar_lea.sflag [#allocation5], %s171
        %s173 = sand.u32 %s43, 1
        %s174 = smul.addr %s173, 2
        %s175 = scalar_lea.vmem [#allocation4], %s174
        %p176 = pneg %p56
        %p177 = pneg %p53
        %p178 = scmp.lt.s32.totalorder %s25, 0
        %s179 = scalar_select %p178, %s25, 0
        %s180 = smul.addr %s179, 2
        %s181 = scalar_lea.vmem %s2, %s180
        %p182 = pneg %p82
        %p183 = pneg %p79
        %p184 = pneg %p110
        %p185 = pneg %p107
        %s186 = sand.u32 %s97, 1
        %s187 = scalar_lea.sflag [#allocation6], %s186
        %s188 = sand.u32 %s97, 1
        %s189 = smul.addr %s188, 2
        %s190 = scalar_lea.vmem [#allocation7], %s189
        %p191 = scmp.lt.s32.totalorder %s25, 0
        %s192 = scalar_select %p191, %s25, 0
        %s193 = smul.addr %s192, 2
        %s194 = scalar_lea.vmem %s2, %s193
        %v195 = vld [vmem:[%s166] sm:$0x3]
        %v196 = vld [vmem:[%s194] sm:$0x3]
        %v197 = vadd.f32 %v195, %v196
        %198 = vst [vmem:[%s190] sm:$0x3] %v197
        %s199 = sand.u32 %s97, 1
        %s200 = scalar_lea.sflag [#allocation6], %s199
        %s201 = sand.u32 %s97, 1
        %s202 = smul.addr %s201, 2
        %s203 = scalar_lea.vmem [#allocation7], %s202
        // Predicated region
        $region33: #{tpu_custom_call.1} parent=27 // pred_check
          %p204 = pneg %p107
        $region34: #{tpu_custom_call.1} parent=27 // pred_check_branch
          %206 = sbr.rel (%p204) target = $region36
        $region35: #{tpu_custom_call.1} parent=27 // pred_region
          %s208 = ssub.s32 32, 32
          %209 = vsyncadd %s200, %s208
          %s210 = sadd.s32 %s25, %s26
          %s211 = smul.addr %s210, 32
          %s212 = scalar_lea.hbm %s3, %s211
          %s214 = sshll.u32 %s203, 4
          %s215 = int_to_ptr.vmem [resolvable:$true] %s214
          %217 = dma.vmem_to_hbm [thread:$0]  %s215, 32, %s212, %s200
        $region36: #{tpu_custom_call.1} parent=27 // pred_fallthru
          _
      $region28: #{tpu_custom_call.1} parent=5 // pred_fallthru
        _
      %p218 = scmp.le.s32.totalorder 2, %s16
      // Predicated region
      $region37: #{tpu_custom_call.1} parent=5 // pred_check
        %p219 = pneg %p218
      $region38: #{tpu_custom_call.1} parent=5 // pred_check_branch
        %221 = sbr.rel (%p219) target = $region40
      $region39: #{tpu_custom_call.1} parent=5 // pred_region
        %s222 = ssub.s32 %s16, 2
        // Predicated region
        $region41: #{tpu_custom_call.1} parent=39 // pred_check
          %p223 = pneg %p113
        $region42: #{tpu_custom_call.1} parent=39 // pred_check_branch
          %225 = sbr.rel (%p223) target = $region44
        $region43: #{tpu_custom_call.1} parent=39 // pred_region
          %s226 = sand.u32 %s98, 1
          %s227 = scalar_lea.sflag [#allocation6], %s226
          %s228 = sand.u32 %s98, 1
          %s229 = smul.addr %s228, 2
          %s230 = scalar_lea.vmem [#allocation7], %s229
          %231 = dma.done %s227, 32
        $region44: #{tpu_custom_call.1} parent=39 // pred_fallthru
          _
      $region40: #{tpu_custom_call.1} parent=5 // pred_fallthru
        _
    $region6: #{tpu_custom_call.1} parent=1 // loop_footer
      %s20 = sadd.s32 1, %s16
    $region7: #{tpu_custom_call.1} parent=1 // loop_footer_branch
      %15 = sbr.rel target = $region3
    $region8: #{tpu_custom_call.1} parent=1 // loop_exit
      _
    %232 = vsyncpa [#allocation5], 1
    %s233 = scalar_lea.sflag [#allocation5], 1
    %234 = vsyncpa %s233, 1
    %235 = vsyncpa [#allocation6], 1
    %s236 = scalar_lea.sflag [#allocation6], 1
    %237 = vsyncpa %s236, 1

</llo_original>
